<compile_context>
chip_gen: v7x
topology: tpu7x:2x2x1
jax: 0.10.0
libtpu: 0.0.40
codegen_flags: <defaults>
</compile_context>

<pallas_src>
import functools

import jax
import jax.numpy as jnp
from jax.experimental import pallas as pl
from jax.experimental.pallas import tpu as pltpu


def _hgnn_kernel_fused(x_ref, w_ref, b_ref, out_ref, *, hid_dim, out_dim):
    """Single matmul; one slab [emb | log_softmax | softmax] written with sub-slice stores."""
    x = x_ref[...]
    # [emb | logic] = x @ [W1 | W1@W2] + [b1 | b1@W2 + b2]   (one wide MXU call)
    y = jnp.dot(x, w_ref[...], preferred_element_type=jnp.float32) + b_ref[...]
    emb = y[:, :hid_dim]
    logic = y[:, hid_dim:]

    # numerically-stable log_softmax / softmax over the class (last) dimension
    m = jnp.max(logic, axis=-1, keepdims=True)
    z = logic - m
    s = jnp.sum(jnp.exp(z), axis=-1, keepdims=True)
    logsm = z - jnp.log(s)
    sm = jnp.exp(logsm)  # softmax without a divide (EUP exp; VPU divide avoided)

    # single output slab, three sub-slice stores (no concatenate lane relayout)
    out_ref[:, :hid_dim] = emb.astype(out_ref.dtype)
    out_ref[:, hid_dim:hid_dim + out_dim] = logsm.astype(out_ref.dtype)
    out_ref[:, hid_dim + out_dim:] = sm.astype(out_ref.dtype)


def _hgnn_kernel_split(x_ref, w_ref, b_ref, probs_ref, emb_ref, *, hid_dim, out_dim):
    """Variant with separate emb output (e.g. bf16 emb) + one [log_softmax | softmax] slab."""
    x = x_ref[...]
    y = jnp.dot(x, w_ref[...], preferred_element_type=jnp.float32) + b_ref[...]
    emb = y[:, :hid_dim]
    logic = y[:, hid_dim:]

    m = jnp.max(logic, axis=-1, keepdims=True)
    z = logic - m
    s = jnp.sum(jnp.exp(z), axis=-1, keepdims=True)
    logsm = z - jnp.log(s)
    sm = jnp.exp(logsm)

    emb_ref[...] = emb.astype(emb_ref.dtype)
    probs_ref[:, :out_dim] = logsm.astype(probs_ref.dtype)
    probs_ref[:, out_dim:] = sm.astype(probs_ref.dtype)


def _round_up(a, b):
    return (a + b - 1) // b * b


def _vmem_budget_bytes():
    """Leave margin under physical VMEM (v7x: 64 MiB, v5e/v6e: 128 MiB)."""
    try:
        cap = int(getattr(pltpu.get_tpu_info(), "vmem_capacity_bytes", 64 << 20))
    except Exception:
        cap = 64 << 20
    return max(24 << 20, min(cap - (16 << 20), 96 << 20))


@functools.partial(jax.jit, static_argnames=("tile_n", "input_dtype", "emb_dtype"))
def hgnn_forward(x, w1, b1, w2, b2, *, tile_n=None, input_dtype=None, emb_dtype=jnp.float32):
    """Fused HGNN forward.  x: (N, feat_dim) float32.

    Returns (log_softmax(logic), softmax(logic), embedding), matching the PyTorch
    module's forward return tuple.

    input_dtype=jnp.bfloat16 casts only the streamed x (weights stay f32) — halves the
    x read stream on any generation (v5e/v6e/v7x; only the MXU sees bf16).
    emb_dtype=jnp.bfloat16 halves the embedding writeback stream (probs stay f32).
    """
    n, feat_dim = x.shape
    hid_dim = w1.shape[1]
    out_dim = w2.shape[1]

    # Pre-fuse the two linears so the kernel needs a single matmul reading only x:
    #   logic = (x@W1 + b1)@W2 + b2 = x@(W1@W2) + (b1@W2 + b2)
    w12 = jnp.dot(w1, w2, preferred_element_type=jnp.float32)
    b12 = jnp.dot(b1, w2, preferred_element_type=jnp.float32) + b2
    w_cat = jnp.concatenate([w1, w12], axis=1)   # (feat_dim, hid_dim + out_dim)
    b_cat = jnp.concatenate([b1, b12], axis=1)   # (1, hid_dim + out_dim)

    x_in = x if input_dtype is None else x.astype(input_dtype)
    itemsize_x = jnp.dtype(x_in.dtype).itemsize
    emb_itemsize = jnp.dtype(emb_dtype).itemsize
    fused = jnp.dtype(emb_dtype) == jnp.dtype(jnp.float32)

    row_align = max(8, 32 // itemsize_x)          # 8 for f32, 16 for bf16 (sublane packing)
    n_aligned = _round_up(n, row_align)

    # HBM traffic per row per step (read x + write outputs)
    out_row_bytes = hid_dim * emb_itemsize + 2 * out_dim * 4
    row_bytes = feat_dim * itemsize_x + out_row_bytes
    w_bytes = feat_dim * (hid_dim + out_dim) * 4 + (hid_dim + out_dim) * 4

    # 1) byte-budget tile: ~4 MiB of traffic/step amortizes the ~0.35us/step overhead
    tile = max(1024, min(8192, (4 << 20) // max(row_bytes, 1)))
    # 2) VMEM budget actually constrains the working set (double-buffered streams + weights)
    vmem_budget = _vmem_budget_bytes()
    vmem_tile_cap = (vmem_budget - 2 * w_bytes - (2 << 20)) // max(2 * row_bytes, 1)
    tile = min(tile, max(row_align, vmem_tile_cap))
    # 3) keep >= 2 grid steps so v7x's two TensorCores both get work
    tile = min(tile, _round_up(pl.cdiv(n, 2), row_align))
    # user override
    if tile_n is not None:
        tile = min(tile, tile_n)
    tile = max(row_align, _round_up(tile, row_align))
    tile = min(tile, n_aligned)

    n_pad = _round_up(n, tile)
    if n_pad != n:
        x_in = jnp.pad(x_in, ((0, n_pad - n), (0, 0)))
    grid = (n_pad // tile,)

    # Explicit VMEM limit derived from the actual per-step allocation + headroom.
    per_step = tile * row_bytes
    vmem_limit = min(max(2 * per_step + 2 * w_bytes + (2 << 20), 16 << 20), vmem_budget)

    in_specs = [
        pl.BlockSpec((tile, feat_dim), lambda i: (i, 0)),                 # x tile (streamed)
        pl.BlockSpec((feat_dim, hid_dim + out_dim), lambda i: (0, 0)),    # [W1 | W1@W2] resident
        pl.BlockSpec((1, hid_dim + out_dim), lambda i: (0, 0)),           # [b1 | b1@W2 + b2]
    ]

    if fused:
        kernel = functools.partial(_hgnn_kernel_fused, hid_dim=hid_dim, out_dim=out_dim)
        out_specs = pl.BlockSpec((tile, hid_dim + 2 * out_dim), lambda i: (i, 0))
        out_shape = jax.ShapeDtypeStruct((n_pad, hid_dim + 2 * out_dim), jnp.float32)
    else:
        kernel = functools.partial(_hgnn_kernel_split, hid_dim=hid_dim, out_dim=out_dim)
        out_specs = [
            pl.BlockSpec((tile, 2 * out_dim), lambda i: (i, 0)),          # [log_softmax | softmax]
            pl.BlockSpec((tile, hid_dim), lambda i: (i, 0)),              # embedding (e.g. bf16)
        ]
        out_shape = (
            jax.ShapeDtypeStruct((n_pad, 2 * out_dim), jnp.float32),
            jax.ShapeDtypeStruct((n_pad, hid_dim), emb_dtype),
        )

    result = pl.pallas_call(
        kernel,
        out_shape=out_shape,
        grid_spec=pltpu.PrefetchScalarGridSpec(
            num_scalar_prefetch=0,
            grid=grid,
            in_specs=in_specs,
            out_specs=out_specs,
        ),
        compiler_params=pltpu.CompilerParams(
            dimension_semantics=("parallel",),
            vmem_limit_bytes=vmem_limit,
        ),
    )(x_in, w_cat, b_cat)

    if fused:
        slab = result
        emb = slab[:n, :hid_dim]
        log_sm = slab[:n, hid_dim:hid_dim + out_dim]
        sm = slab[:n, hid_dim + out_dim:]
    else:
        probs, emb_full = result
        log_sm = probs[:n, :out_dim]
        sm = probs[:n, out_dim:]
        emb = emb_full[:n]
    return log_sm, sm, emb


def _xavier_normal(key, shape, gain):
    fan_in, fan_out = shape[0], shape[1]
    std = gain * (2.0 / (fan_in + fan_out)) ** 0.5
    return std * jax.random.normal(key, shape, dtype=jnp.float32)


def _reference(x, w1, b1, w2, b2):
    emb = x @ w1 + b1
    logic = emb @ w2 + b2
    return (jax.nn.log_softmax(logic, axis=1),
            jax.nn.softmax(logic, axis=1),
            emb)


if __name__ == "__main__":
    # Small shapes consistent with the module: N nodes, feat_dim, hid_dim, out_dim.
    N, FEAT_DIM, HID_DIM, OUT_DIM = 16, 16, 32, 8   # hid_dim divisible by num_head=8

    key = jax.random.PRNGKey(0)
    k_x, k_w1, k_b1, k_w2, k_b2, k_x2 = jax.random.split(key, 6)

    # node features (data.x)
    x = jax.random.normal(k_x, (N, FEAT_DIM), dtype=jnp.float32)

    # self.mlp = nn.Linear(feat_dim, hid_dim)  -> stored as (in, out)
    bound1 = 1.0 / (FEAT_DIM ** 0.5)
    w1 = jax.random.uniform(k_w1, (FEAT_DIM, HID_DIM), jnp.float32, -bound1, bound1)
    b1 = jax.random.uniform(k_b1, (1, HID_DIM), jnp.float32, -bound1, bound1)

    # self.last_layer = nn.Linear(hid_dim, out_dim), xavier_normal_(gain=1.414)
    w2 = _xavier_normal(k_w2, (HID_DIM, OUT_DIM), gain=1.414)
    bound2 = 1.0 / (HID_DIM ** 0.5)
    b2 = jax.random.uniform(k_b2, (1, OUT_DIM), jnp.float32, -bound2, bound2)

    ref_log_sm, ref_sm, ref_emb = _reference(x, w1, b1, w2, b2)

    # 1) f32 fused-slab path (single output DMA per step)
    log_sm, sm, emb = hgnn_forward(x, w1, b1, w2, b2)
    jax.block_until_ready((log_sm, sm, emb))
    assert jnp.allclose(log_sm, ref_log_sm, atol=1e-4, rtol=1e-4)
    assert jnp.allclose(sm, ref_sm, atol=1e-4, rtol=1e-4)
    assert jnp.allclose(emb, ref_emb, atol=1e-4, rtol=1e-4)

    # 2) ragged-N path (exercises auto-tiling, zero padding and a multi-step grid)
    N2 = 50
    x2 = jax.random.normal(k_x2, (N2, FEAT_DIM), dtype=jnp.float32)
    log_sm2, sm2, emb2 = hgnn_forward(x2, w1, b1, w2, b2)
    jax.block_until_ready((log_sm2, sm2, emb2))
    ref_log_sm2, ref_sm2, ref_emb2 = _reference(x2, w1, b1, w2, b2)
    assert log_sm2.shape == (N2, OUT_DIM) and emb2.shape == (N2, HID_DIM)
    assert jnp.allclose(log_sm2, ref_log_sm2, atol=1e-4, rtol=1e-4)
    assert jnp.allclose(sm2, ref_sm2, atol=1e-4, rtol=1e-4)
    assert jnp.allclose(emb2, ref_emb2, atol=1e-4, rtol=1e-4)

    # 3) bf16-input path (x cast only, weights stay f32 for parity) — looser tolerance.
    log_sm3, sm3, emb3 = hgnn_forward(x, w1, b1, w2, b2, input_dtype=jnp.bfloat16)
    jax.block_until_ready((log_sm3, sm3, emb3))
    assert jnp.allclose(log_sm3, ref_log_sm, atol=5e-2, rtol=5e-2)
    assert jnp.allclose(sm3, ref_sm, atol=5e-2, rtol=5e-2)
    assert jnp.allclose(emb3, ref_emb, atol=5e-2, rtol=5e-2)

    # 4) bf16 embedding output path (f32 x, f32 probs; emb writeback halved)
    log_sm4, sm4, emb4 = hgnn_forward(x, w1, b1, w2, b2, emb_dtype=jnp.bfloat16)
    jax.block_until_ready((log_sm4, sm4, emb4))
    assert emb4.dtype == jnp.bfloat16
    assert jnp.allclose(log_sm4, ref_log_sm, atol=1e-4, rtol=1e-4)
    assert jnp.allclose(sm4, ref_sm, atol=1e-4, rtol=1e-4)
    assert jnp.allclose(emb4.astype(jnp.float32), ref_emb, atol=5e-2, rtol=5e-2)

    print("KERNEL_OK")
</pallas_src>

<mosaic_0001>
module attributes {stable_mosaic.version = 11 : i64} {
  func.func @_hgnn_kernel_fused(%arg0: i32, %arg1: memref<8x16xf32, #tpu.memory_space<vmem>>, %arg2: memref<16x40xf32, #tpu.memory_space<vmem>>, %arg3: memref<1x40xf32, #tpu.memory_space<vmem>>, %arg4: memref<8x48xf32, #tpu.memory_space<vmem>>) attributes {dimension_semantics = [#tpu.dimension_semantics<parallel>], iteration_bounds = array<i64: 2>, scalar_prefetch = 0 : i64, scratch_operands = 0 : i64, tpu.core_type = #tpu.core_type<tc>, window_params = [{transform_indices = @transform_0, window_bounds = array<i64: 8, 16>}, {pipeline_mode = #tpu.pipeline_mode<synchronous>, transform_indices = @transform_1, window_bounds = array<i64: 16, 40>}, {pipeline_mode = #tpu.pipeline_mode<synchronous>, transform_indices = @transform_2, window_bounds = array<i64: 1, 40>}, {transform_indices = @transform_3, window_bounds = array<i64: 8, 48>}]} {
    %c0 = arith.constant 0 : index
    %c0_0 = arith.constant 0 : index
    %0 = vector.load %arg1[%c0, %c0_0] : memref<8x16xf32, #tpu.memory_space<vmem>>, vector<8x16xf32>
    %c0_1 = arith.constant 0 : index
    %c0_2 = arith.constant 0 : index
    %1 = vector.load %arg2[%c0_1, %c0_2] : memref<16x40xf32, #tpu.memory_space<vmem>>, vector<16x40xf32>
    %cst = arith.constant dense<0.000000e+00> : vector<8x40xf32>
    %2 = tpu.matmul %0, %1, %cst {dimension_numbers = #tpu.dot_dimension_numbers<[1], [0], [0], [1], [0, 0, 1, 1], [], []>} : vector<8x16xf32>, vector<16x40xf32>, vector<8x40xf32> -> vector<8x40xf32>
    %c0_3 = arith.constant 0 : index
    %c0_4 = arith.constant 0 : index
    %3 = vector.load %arg3[%c0_3, %c0_4] : memref<1x40xf32, #tpu.memory_space<vmem>>, vector<1x40xf32>
    %4 = vector.broadcast %3 : vector<1x40xf32> to vector<8x40xf32>
    %5 = arith.addf %2, %4 : vector<8x40xf32>
    %6 = vector.extract_strided_slice %5 {offsets = [0, 0], sizes = [8, 32], strides = [1, 1]} : vector<8x40xf32> to vector<8x32xf32>
    %7 = vector.extract_strided_slice %5 {offsets = [0, 32], sizes = [8, 8], strides = [1, 1]} : vector<8x40xf32> to vector<8x8xf32>
    %cst_5 = arith.constant dense<0xFF800000> : vector<8xf32>
    %8 = vector.multi_reduction <maximumf>, %7, %cst_5 [1] : vector<8x8xf32> to vector<8xf32>
    %9 = vector.shape_cast %8 : vector<8xf32> to vector<8x1xf32>
    %10 = vector.broadcast %9 : vector<8x1xf32> to vector<8x8xf32>
    %11 = arith.subf %7, %10 : vector<8x8xf32>
    %12 = math.exp %11 : vector<8x8xf32>
    %cst_6 = arith.constant dense<0.000000e+00> : vector<8xf32>
    %13 = vector.multi_reduction <add>, %12, %cst_6 [1] : vector<8x8xf32> to vector<8xf32>
    %14 = vector.shape_cast %13 : vector<8xf32> to vector<8x1xf32>
    %15 = math.log %14 : vector<8x1xf32>
    %16 = vector.broadcast %15 : vector<8x1xf32> to vector<8x8xf32>
    %17 = arith.subf %11, %16 : vector<8x8xf32>
    %18 = math.exp %17 : vector<8x8xf32>
    %c0_7 = arith.constant 0 : index
    %c0_8 = arith.constant 0 : index
    %19 = vector.load %arg4[%c0_7, %c0_8] : memref<8x48xf32, #tpu.memory_space<vmem>>, vector<8x32xf32>
    tpu.vector_store %arg4[%c0_7, %c0_8], %6 {strides = array<i32>} : memref<8x48xf32, #tpu.memory_space<vmem>>, vector<8x32xf32>,
    %c0_9 = arith.constant 0 : index
    %c32 = arith.constant 32 : index
    %20 = vector.load %arg4[%c0_9, %c32] : memref<8x48xf32, #tpu.memory_space<vmem>>, vector<8x8xf32>
    tpu.vector_store %arg4[%c0_9, %c32], %17 {strides = array<i32>} : memref<8x48xf32, #tpu.memory_space<vmem>>, vector<8x8xf32>,
    %c0_10 = arith.constant 0 : index
    %c40 = arith.constant 40 : index
    %21 = vector.load %arg4[%c0_10, %c40] : memref<8x48xf32, #tpu.memory_space<vmem>>, vector<8x8xf32>
    tpu.vector_store %arg4[%c0_10, %c40], %18 {strides = array<i32>} : memref<8x48xf32, #tpu.memory_space<vmem>>, vector<8x8xf32>,
    return
  }
  func.func @transform_0(%arg0: i32) -> (i32, i32) {
    %c0_i32 = arith.constant 0 : i32
    %c0_i32_0 = arith.constant 0 : i32
    return %arg0, %c0_i32 : i32, i32
  }
  func.func @transform_1(%arg0: i32) -> (i32, i32) {
    %c0_i32 = arith.constant 0 : i32
    %c0_i32_0 = arith.constant 0 : i32
    %c0_i32_1 = arith.constant 0 : i32
    return %c0_i32, %c0_i32_0 : i32, i32
  }
  func.func @transform_2(%arg0: i32) -> (i32, i32) {
    %c0_i32 = arith.constant 0 : i32
    %c0_i32_0 = arith.constant 0 : i32
    %c0_i32_1 = arith.constant 0 : i32
    return %c0_i32, %c0_i32_0 : i32, i32
  }
  func.func @transform_3(%arg0: i32) -> (i32, i32) {
    %c0_i32 = arith.constant 0 : i32
    %c0_i32_0 = arith.constant 0 : i32
    return %arg0, %c0_i32 : i32, i32
  }
}

</mosaic_0001>

<llo_original>
// kernel: hgnn_forward.1
$region0: #{hgnn_forward.1}
  #allocation0 [shape = 'u32[]', space=smem, size = 0x4, offset = 0x4, fixed_abs, tag = 'smem constant byte address 0x4 - core index']
  #allocation1 [shape = 'u32[144,128]{1,0:T(1,128)}', space=vmem, size = 0x12000, scoped, tag = 'internal scratch']
  %s0 = inlined_call_operand.vmem [shape: f32[16,16], index: 0, kind: input, shape index: {}]
  %s1 = inlined_call_operand.vmem [shape: f32[16,40], index: 1, kind: input, shape index: {}]
  %s2 = inlined_call_operand.vmem [shape: f32[1,40], index: 2, kind: input, shape index: {}]
  %s3 = inlined_call_operand.vmem [shape: f32[16,48], index: 3, kind: output, shape index: {}]
  %s4 = sld [smem:[#allocation0]]
  $region45: #{hgnn_forward.1} parent=0
    _
  %s6 = ssub.s32 1, %s4
  %s7 = scalar_select 0, %s6, %s4
  loop: start=0, step=1, limit=4
  $region2: #{hgnn_forward.1} parent=0 // loop_pre_header
    _
  $region3: #{hgnn_forward.1} parent=0 // loop_header
    %s9 = sphi 0, %s13
    %p10 = scmp.ge.s32.totalorder %s9, 4
    %s19 = sphi 0, %s21
    %s22 = sphi 0, %s19
    %s23 = sphi 0, %s22
    %s39 = sphi 0, %s23
    %s43 = sphi 0, %s43
    %s45 = sphi 0, %s43
    %s46 = sphi 0, %s45
    %s60 = sphi 0, %s46
    %s64 = sphi 0, %s64
    %s66 = sphi 0, %s64
    %s67 = sphi 0, %s66
    %s81 = sphi 0, %s67
    %s87 = sphi 0, %s89
    %s90 = sphi 0, %s87
    %s91 = sphi 0, %s90
    %s107 = sphi 0, %s91
  $region4: #{hgnn_forward.1} parent=0 // loop_header_branch
    %12 = sbr.rel (%p10) target = $region8
  $region5: #{hgnn_forward.1} parent=0 // loop_body
    %s14 = ssub.s32 %s9, 1
    %s15 = ssub.s32 %s9, 2
    %s16 = sadd.s32 %s9, 1
    %s17 = ssub.s32 %s9, %s16
    %p18 = scmp.eq.s32.totalorder %s17, 0
    %s20 = sadd.s32 %s19, 1
    %s21 = scalar_select %p18, %s19, %s20
    %p24 = pneg %p18
    %p25 = scmp.eq.s32.totalorder %s9, 1
    %p26 = por %p24, %p25
    %p27 = scmp.ne.s32.totalorder %s19, %s22
    %p28 = scmp.eq.s32.totalorder %s9, 0
    %p29 = por %p27, %p28
    %p30 = scmp.ne.s32.totalorder %s19, %s22
    %p31 = scmp.eq.s32.totalorder %s14, 1
    %p32 = por %p30, %p31
    %p33 = scmp.ne.s32.totalorder %s22, %s23
    %p34 = scmp.eq.s32.totalorder %s14, 0
    %p35 = por %p33, %p34
    %p36 = scmp.ne.s32.totalorder %s22, %s23
    %p37 = scmp.eq.s32.totalorder %s15, 1
    %p38 = por %p36, %p37
    %p40 = scmp.ne.s32.totalorder %s23, %s39
    %p41 = scmp.eq.s32.totalorder %s15, 0
    %p42 = por %p40, %p41
    %s44 = sadd.s32 %s43, 1
    %p47 = scmp.eq.s32.totalorder %s9, 1
    %p48 = scmp.ne.s32.totalorder %s43, %s45
    %p49 = scmp.eq.s32.totalorder %s9, 0
    %p50 = por %p48, %p49
    %p51 = scmp.ne.s32.totalorder %s43, %s45
    %p52 = scmp.eq.s32.totalorder %s14, 1
    %p53 = por %p51, %p52
    %p54 = scmp.ne.s32.totalorder %s45, %s46
    %p55 = scmp.eq.s32.totalorder %s14, 0
    %p56 = por %p54, %p55
    %p57 = scmp.ne.s32.totalorder %s45, %s46
    %p58 = scmp.eq.s32.totalorder %s15, 1
    %p59 = por %p57, %p58
    %p61 = scmp.ne.s32.totalorder %s46, %s60
    %p62 = scmp.eq.s32.totalorder %s15, 0
    %p63 = por %p61, %p62
    %s65 = sadd.s32 %s64, 1
    %p68 = scmp.eq.s32.totalorder %s9, 1
    %p69 = scmp.ne.s32.totalorder %s64, %s66
    %p70 = scmp.eq.s32.totalorder %s9, 0
    %p71 = por %p69, %p70
    %p72 = scmp.ne.s32.totalorder %s64, %s66
    %p73 = scmp.eq.s32.totalorder %s14, 1
    %p74 = por %p72, %p73
    %p75 = scmp.ne.s32.totalorder %s66, %s67
    %p76 = scmp.eq.s32.totalorder %s14, 0
    %p77 = por %p75, %p76
    %p78 = scmp.ne.s32.totalorder %s66, %s67
    %p79 = scmp.eq.s32.totalorder %s15, 1
    %p80 = por %p78, %p79
    %p82 = scmp.ne.s32.totalorder %s67, %s81
    %p83 = scmp.eq.s32.totalorder %s15, 0
    %p84 = por %p82, %p83
    %s85 = ssub.s32 %s9, %s16
    %p86 = scmp.eq.s32.totalorder %s85, 0
    %s88 = sadd.s32 %s87, 1
    %s89 = scalar_select %p86, %s87, %s88
    %p92 = pneg %p86
    %p93 = scmp.eq.s32.totalorder %s9, 1
    %p94 = por %p92, %p93
    %p95 = scmp.ne.s32.totalorder %s87, %s90
    %p96 = scmp.eq.s32.totalorder %s9, 0
    %p97 = por %p95, %p96
    %p98 = scmp.ne.s32.totalorder %s87, %s90
    %p99 = scmp.eq.s32.totalorder %s14, 1
    %p100 = por %p98, %p99
    %p101 = scmp.ne.s32.totalorder %s90, %s91
    %p102 = scmp.eq.s32.totalorder %s14, 0
    %p103 = por %p101, %p102
    %p104 = scmp.ne.s32.totalorder %s90, %s91
    %p105 = scmp.eq.s32.totalorder %s15, 1
    %p106 = por %p104, %p105
    %p108 = scmp.ne.s32.totalorder %s91, %s107
    %p109 = scmp.eq.s32.totalorder %s15, 0
    %p110 = por %p108, %p109
    %p111 = scmp.le.s32.totalorder 1, %s9
    %p112 = scmp.lt.s32.totalorder %s9, 3
    %p113 = pnand %p111, %p112
    %p114 = pneg %p113
    // Predicated region
    $region9: #{hgnn_forward.1} parent=5 // pred_check
      _
    $region10: #{hgnn_forward.1} parent=5 // pred_check_branch
      %116 = sbr.rel (%p113) target = $region12
    $region11: #{hgnn_forward.1} parent=5 // pred_region
      %s117 = ssub.s32 %s9, 1
      // Predicated region
      $region13: #{hgnn_forward.1} parent=11 // pred_check
        %p118 = pneg %p56
      $region14: #{hgnn_forward.1} parent=11 // pred_check_branch
        %120 = sbr.rel (%p118) target = $region16
      $region15: #{hgnn_forward.1} parent=11 // pred_region
        _
      $region16: #{hgnn_forward.1} parent=11 // pred_fallthru
        _
      // Predicated region
      $region17: #{hgnn_forward.1} parent=11 // pred_check
        %p121 = pneg %p77
      $region18: #{hgnn_forward.1} parent=11 // pred_check_branch
        %123 = sbr.rel (%p121) target = $region20
      $region19: #{hgnn_forward.1} parent=11 // pred_region
        _
      $region20: #{hgnn_forward.1} parent=11 // pred_fallthru
        _
    $region12: #{hgnn_forward.1} parent=5 // pred_fallthru
      _
    %p124 = scmp.lt.s32.totalorder %s9, 2
    // Predicated region
    $region21: #{hgnn_forward.1} parent=5 // pred_check
      %p125 = pneg %p124
    $region22: #{hgnn_forward.1} parent=5 // pred_check_branch
      %127 = sbr.rel (%p125) target = $region24
    $region23: #{hgnn_forward.1} parent=5 // pred_region
      // Predicated region
      $region25: #{hgnn_forward.1} parent=23 // pred_check
        %p128 = pneg %p29
      $region26: #{hgnn_forward.1} parent=23 // pred_check_branch
        %130 = sbr.rel (%p128) target = $region28
      $region27: #{hgnn_forward.1} parent=23 // pred_region
        %p131 = scmp.lt.s32.totalorder %s9, 1
        %s132 = scalar_select %p131, %s9, 1
        %s133 = smul.addr %s132, 8
        %s134 = scalar_lea.vmem %s0, %s133
      $region28: #{hgnn_forward.1} parent=23 // pred_fallthru
        _
    $region24: #{hgnn_forward.1} parent=5 // pred_fallthru
      _
    %p135 = scmp.le.s32.totalorder 1, %s9
    %p136 = scmp.lt.s32.totalorder %s9, 3
    %p137 = pnand %p135, %p136
    %p138 = pneg %p137
    // Predicated region
    $region29: #{hgnn_forward.1} parent=5 // pred_check
      _
    $region30: #{hgnn_forward.1} parent=5 // pred_check_branch
      %140 = sbr.rel (%p137) target = $region32
    $region31: #{hgnn_forward.1} parent=5 // pred_region
      %s141 = ssub.s32 %s9, 1
      %p142 = scmp.lt.s32.totalorder %s14, 1
      %s143 = scalar_select %p142, %s14, 1
      %s144 = smul.addr %s143, 8
      %s145 = scalar_lea.vmem %s0, %s144
      %p146 = pneg %p35
      %p147 = pneg %p32
      %p148 = pneg %p56
      %p149 = pneg %p53
      %p150 = pneg %p77
      %p151 = pneg %p74
      %p152 = pneg %p103
      %p153 = pneg %p100
      %p154 = scmp.lt.s32.totalorder %s14, 1
      %s155 = scalar_select %p154, %s14, 1
      %s156 = smul.addr %s155, 8
      %s157 = scalar_lea.vmem %s3, %s156
      %p158 = scmp.lt.s32.totalorder %s14, 1
      %s159 = scalar_select %p158, %s14, 1
      %s160 = smul.addr %s159, 8
      %s161 = scalar_lea.vmem %s0, %s160
      %p162 = scmp.lt.s32.totalorder %s14, 1
      %s163 = scalar_select %p162, %s14, 1
      %s164 = smul.addr %s163, 8
      %s165 = scalar_lea.vmem %s3, %s164
      %v166 = vld [vmem:[%s161] sm:$0xff]
      %v167 = vld [vmem:[%s1] sm:$0xff]
      %v168 = vld [vmem:[%s1 + $0x8] sm:$0xff]
      %v169 = vld [vmem:[%s2] sm:$0x1]
      %v171 = vlaneseq
      %v172 = vshrl.u32 %v171, 7
      %v173 = vsub.s32 0, %v172
      %v174 = vrot.slane %v169, %v173
      %vm176 = vcmask 130048
      %v178 = vsel %vm176, %v166, 0
      %180 = vmatprep.subr.mxu0 0.0
      %181 = vmatpush1.msra.mxu0 %v167
      %182 = vmatprep.subr.mxu0 0.0
      %183 = vmatpush1.msra.mxu0 %v168
      %184 = vmatprep.subr.mxu0 0.0
      %185 = vmatpush1.msra.mxu0 0.0
      %186 = vmatprep.subr.mxu0 0.0
      %187 = vmatpush1.msra.mxu0 0.0
      %188 = vmatprep.subr.mxu0 0.0
      %189 = vmatpush1.msra.mxu0 0.0
      %190 = vmatprep.subr.mxu0 0.0
      %191 = vmatpush1.msra.mxu0 0.0
      %192 = vmatprep.subr.mxu0 0.0
      %193 = vmatpush1.msra.mxu0 0.0
      %194 = vmatprep.subr.mxu0 0.0
      %195 = vmatpush1.msra.mxu0 0.0
      %196 = vmatprep.subr.mxu0 0.0
      %197 = vmatpush1.msra.mxu0 0.0
      %198 = vmatprep.subr.mxu0 0.0
      %199 = vmatpush1.msra.mxu0 0.0
      %200 = vmatprep.subr.mxu0 0.0
      %201 = vmatpush1.msra.mxu0 0.0
      %202 = vmatprep.subr.mxu0 0.0
      %203 = vmatpush1.msra.mxu0 0.0
      %204 = vmatprep.subr.mxu0 0.0
      %205 = vmatpush1.msra.mxu0 0.0
      %206 = vmatprep.subr.mxu0 0.0
      %207 = vmatpush1.msra.mxu0 0.0
      %208 = vmatprep.subr.mxu0 0.0
      %209 = vmatpush1.msra.mxu0 0.0
      %210 = vmatprep.subr.mxu0 0.0
      %211 = vmatpush1.msra.mxu0 0.0
      %212 = vmatprep.subr.mxu0 0.0
      %213 = vmatpush1.msra.mxu0 0.0
      %214 = vmatprep.subr.mxu0 0.0
      %215 = vmatpush1.msra.mxu0 0.0
      %216 = vmatprep.subr.mxu0 0.0
      %217 = vmatpush1.msra.mxu0 0.0
      %218 = vmatprep.subr.mxu0 0.0
      %219 = vmatpush1.msra.mxu0 0.0
      %220 = vmatprep.subr.mxu0 0.0
      %221 = vmatpush1.msra.mxu0 0.0
      %222 = vmatprep.subr.mxu0 0.0
      %223 = vmatpush1.msra.mxu0 0.0
      %224 = vmatprep.subr.mxu0 0.0
      %225 = vmatpush1.msra.mxu0 0.0
      %226 = vmatprep.subr.mxu0 0.0
      %227 = vmatpush1.msra.mxu0 0.0
      %228 = vmatprep.subr.mxu0 0.0
      %229 = vmatpush1.msra.mxu0 0.0
      %230 = vmatprep.subr.mxu0 0.0
      %231 = vmatpush1.msra.mxu0 0.0
      %232 = vmatprep.subr.mxu0 0.0
      %233 = vmatpush1.msra.mxu0 0.0
      %234 = vmatprep.subr.mxu0 0.0
      %235 = vmatpush1.msra.mxu0 0.0
      %236 = vmatprep.subr.mxu0 0.0
      %237 = vmatpush1.msra.mxu0 0.0
      %238 = vmatprep.subr.mxu0 0.0
      %239 = vmatpush1.msra.mxu0 0.0
      %240 = vmatprep.subr.mxu0 0.0
      %241 = vmatpush1.msra.mxu0 0.0
      %242 = vmatprep.subr.mxu0 0.0
      %243 = vmatpush1.msra.mxu0 0.0
      %244 = vmatprep.mubr.f32.mxu0 0.0
      %245 = vmatmul.mubr.f32.gmra.mrb[0].mxu0 %v178
      %v246 = vpop.f32.mrb[0].mxu0
      %v247 = vadd.f32 %v174, %v246
      %v248 = vpop.f32.mrb[0].mxu0
      %249 = vdwg.mxu0
      %vm250 = vcmask 326912
      %v251 = vsel %vm250, %v247, -inf
      %252 = vmax.xlane.f32.xlu0 %v251
      %v253 = vpop.xlane.xlu0 %252
      %v254 = vsub.f32 %v247, %v253
      %v255 = vmul.f32 %v254, 1.442695
      %v256 = vpow.pop %v255
      %258 = vrot.lane.b32.xlu0 %v256, 96
      %v259 = vpop.permute.xlu0 %258
      %vm261 = vcmask 64512
      %v262 = vsel %vm261, %v259, 0.0
      %263 = vadd.xlane.f32.xlu0 %v262
      %v264 = vpop.xlane.xlu0 %263
      %v265 = vlog2.pop %v264
      %v266 = vmul.f32 %v265, 0.6931472
      %v267 = vsub.f32 %v254, %v266
      %v268 = vmul.f32 %v267, 1.442695
      %v269 = vpow.pop %v268
      %vm270 = vcmask 261120
      %271 = vst.msk [vmem:[%s165] sm:$0xff] %vm270, %v247
      %272 = vst.msk [vmem:[%s165] sm:$0xff] %vm250, %v267
      %274 = vrot.lane.b32.xlu0 %v269, 8
      %v275 = vpop.permute.xlu0 %274
      %vm277 = vcmask 392512
      %278 = vst.msk [vmem:[%s165] sm:$0xff] %vm277, %v275
      %p279 = scmp.lt.s32.totalorder %s14, 1
      %s280 = scalar_select %p279, %s14, 1
      %s281 = smul.addr %s280, 8
      %s282 = scalar_lea.vmem %s3, %s281
      // Predicated region
      $region33: #{hgnn_forward.1} parent=31 // pred_check
        %p283 = pneg %p100
      $region34: #{hgnn_forward.1} parent=31 // pred_check_branch
        %285 = sbr.rel (%p283) target = $region36
      $region35: #{hgnn_forward.1} parent=31 // pred_region
        _
      $region36: #{hgnn_forward.1} parent=31 // pred_fallthru
        _
    $region32: #{hgnn_forward.1} parent=5 // pred_fallthru
      _
    %p286 = scmp.le.s32.totalorder 2, %s9
    // Predicated region
    $region37: #{hgnn_forward.1} parent=5 // pred_check
      %p287 = pneg %p286
    $region38: #{hgnn_forward.1} parent=5 // pred_check_branch
      %289 = sbr.rel (%p287) target = $region40
    $region39: #{hgnn_forward.1} parent=5 // pred_region
      %s290 = ssub.s32 %s9, 2
      // Predicated region
      $region41: #{hgnn_forward.1} parent=39 // pred_check
        %p291 = pneg %p106
      $region42: #{hgnn_forward.1} parent=39 // pred_check_branch
        %293 = sbr.rel (%p291) target = $region44
      $region43: #{hgnn_forward.1} parent=39 // pred_region
        %p294 = scmp.lt.s32.totalorder %s15, 1
        %s295 = scalar_select %p294, %s15, 1
        %s296 = smul.addr %s295, 8
        %s297 = scalar_lea.vmem %s3, %s296
      $region44: #{hgnn_forward.1} parent=39 // pred_fallthru
        _
    $region40: #{hgnn_forward.1} parent=5 // pred_fallthru
      _
  $region6: #{hgnn_forward.1} parent=0 // loop_footer
    %s13 = sadd.s32 1, %s9
  $region7: #{hgnn_forward.1} parent=0 // loop_footer_branch
    %8 = sbr.rel target = $region3
  $region8: #{hgnn_forward.1} parent=0 // loop_exit
    _

</llo_original>
